<compile_context>
chip_gen: v6e
topology: v6e:2x2x1
jax: 0.10.0
libtpu: 0.0.40
codegen_flags: <defaults>
</compile_context>

<pallas_src>
import functools
import math

import jax
import jax.numpy as jnp
from jax.experimental import pallas as pl
from jax.experimental.pallas import tpu as pltpu


_BLOCK_BUDGET_BYTES = 4 * 1024 * 1024   # per input, per pipeline buffer
_VMEM_LIMIT_BYTES = 48 * 1024 * 1024    # below v7x's 64 MiB physical VMEM
_MAX_MID_C = 2048                       # larger reduce dims -> row kernel


def _finalize(dot, n1, n2, eps):
    # similarity = dot / max(||x1|| * ||x2||, eps)
    # sqrt() each squared norm BEFORE multiplying (instead of sqrt(n1*n2)) so
    # the product of squared norms cannot overflow float32.
    # pl.reciprocal(approx=True) would push the divide fully onto the (idle)
    # EUP at ~1e-4 relative error; keep the exact form for torch-level
    # accuracy.  All of this is epilogue noise on a memory-bound kernel.
    denom = jnp.maximum(jnp.sqrt(n1) * jnp.sqrt(n2), jnp.float32(eps))
    return dot * pl.reciprocal(denom, approx=False)


# ---------------------------------------------------------------------------
# Interior-dim kernel: x1, x2 blocks are (TP, C, TS); reduce over axis 1.
# ---------------------------------------------------------------------------
def _cosine_mid_kernel(x1_ref, x2_ref, o_ref, *, eps):
    x1 = x1_ref[...].astype(jnp.float32)          # (TP, C, TS)
    x2 = x2_ref[...].astype(jnp.float32)
    dot = jnp.sum(x1 * x2, axis=1)                # (TP, TS)
    n1 = jnp.sum(x1 * x1, axis=1)
    n2 = jnp.sum(x2 * x2, axis=1)
    o_ref[...] = _finalize(dot, n1, n2, eps).astype(o_ref.dtype)


def _cosine_mid(x1, x2, eps, out_dtype):
    """x1, x2: (P, C, S); cosine similarity over axis 1 -> (P, S)."""
    P, C, S = x1.shape
    itemsize = max(x1.dtype.itemsize, x2.dtype.itemsize)
    c_pad = ((C + 7) // 8) * 8                    # VMEM sublane padding of C
    row_bytes = c_pad * itemsize

    # Lane tile over S: full S when small, else a multiple of 128 sized so an
    # 8-row block stays within the per-buffer VMEM budget.
    ts_cap = max(128, (_BLOCK_BUDGET_BYTES // (8 * row_bytes)) // 128 * 128)
    if S <= min(1024, ts_cap):
        ts = S
    else:
        ts = min(1024, ts_cap)

    # Row tile over P: either all of P or a multiple of 8 (output-block rule).
    max_tp = max(1, _BLOCK_BUDGET_BYTES // (row_bytes * ts))
    if P <= max_tp:
        tp = P
    elif max_tp >= 8:
        tp = (max_tp // 8) * 8
    else:
        tp = min(P, 8)

    # Keep at least two grid steps when there is enough work so both
    # TensorCores (v7x megacore) can share the bandwidth.
    if pl.cdiv(P, tp) * pl.cdiv(S, ts) == 1 and S >= 256:
        ts = max(128, (pl.cdiv(S, 2) // 128) * 128)

    grid = (pl.cdiv(P, tp), pl.cdiv(S, ts))
    return pl.pallas_call(
        functools.partial(_cosine_mid_kernel, eps=eps),
        out_shape=jax.ShapeDtypeStruct((P, S), out_dtype),
        grid_spec=pltpu.PrefetchScalarGridSpec(
            num_scalar_prefetch=0,
            grid=grid,
            in_specs=[
                pl.BlockSpec((tp, C, ts), lambda p, s: (p, 0, s)),
                pl.BlockSpec((tp, C, ts), lambda p, s: (p, 0, s)),
            ],
            out_specs=pl.BlockSpec((tp, ts), lambda p, s: (p, s)),
        ),
        compiler_params=pltpu.CompilerParams(
            dimension_semantics=("parallel", "parallel"),
            vmem_limit_bytes=_VMEM_LIMIT_BYTES,
        ),
    )(x1, x2)


# ---------------------------------------------------------------------------
# Last-dim kernel: x1, x2 blocks are (TM, DK); reduce along lanes, D tiled
# over an "arbitrary" grid axis with VMEM scratch accumulators.
# ---------------------------------------------------------------------------
def _cosine_rows_kernel(x1_ref, x2_ref, o_ref, dot_acc, n1_acc, n2_acc,
                        *, eps, d_total, d_block):
    k = pl.program_id(1)

    @pl.when(k == 0)
    def _init():
        dot_acc[...] = jnp.zeros_like(dot_acc)
        n1_acc[...] = jnp.zeros_like(n1_acc)
        n2_acc[...] = jnp.zeros_like(n2_acc)

    x1 = x1_ref[...].astype(jnp.float32)          # (TM, DK)
    x2 = x2_ref[...].astype(jnp.float32)
    if d_total % d_block != 0:
        # Ragged last reduction block: zero the out-of-range columns so they
        # cannot contaminate the row sums.  (Static decision; no cost when
        # the block divides D.)
        col = jax.lax.broadcasted_iota(jnp.int32, x1.shape, 1) + k * d_block
        valid = col < d_total
        x1 = jnp.where(valid, x1, 0.0)
        x2 = jnp.where(valid, x2, 0.0)

    dot_acc[...] += jnp.sum(x1 * x2, axis=-1, keepdims=True)
    n1_acc[...] += jnp.sum(x1 * x1, axis=-1, keepdims=True)
    n2_acc[...] += jnp.sum(x2 * x2, axis=-1, keepdims=True)

    @pl.when(k == pl.num_programs(1) - 1)
    def _finish():
        # Output stays (TM, 1): in this path output bytes are <= 1/(2*D) of
        # the HBM traffic, and it avoids a risky sublane->lane relayout.
        o_ref[...] = _finalize(dot_acc[...], n1_acc[...], n2_acc[...],
                               eps).astype(o_ref.dtype)


def _cosine_rows(x1, x2, eps, out_dtype):
    """x1, x2: (M, D); cosine similarity along the last axis -> (M,)."""
    M, D = x1.shape
    itemsize = max(x1.dtype.itemsize, x2.dtype.itemsize)

    dk = D if D <= 2048 else 2048             # full D, or a multiple of 128
    max_tm = max(8, (_BLOCK_BUDGET_BYTES // (dk * itemsize)) // 8 * 8)
    tm = min(1024, max_tm)
    if M <= tm:
        tm = M
    if M == tm and M >= 16:
        # Split the row axis so both TensorCores get work (v7x megacore).
        tm = ((M + 15) // 16) * 8

    grid = (pl.cdiv(M, tm), pl.cdiv(D, dk))
    out = pl.pallas_call(
        functools.partial(_cosine_rows_kernel, eps=eps, d_total=D, d_block=dk),
        out_shape=jax.ShapeDtypeStruct((M, 1), out_dtype),
        grid_spec=pltpu.PrefetchScalarGridSpec(
            num_scalar_prefetch=0,
            grid=grid,
            in_specs=[
                pl.BlockSpec((tm, dk), lambda i, k: (i, k)),
                pl.BlockSpec((tm, dk), lambda i, k: (i, k)),
            ],
            out_specs=pl.BlockSpec((tm, 1), lambda i, k: (i, 0)),
            scratch_shapes=[
                pltpu.VMEM((tm, 1), jnp.float32),   # dot accumulator
                pltpu.VMEM((tm, 1), jnp.float32),   # ||x1||^2 accumulator
                pltpu.VMEM((tm, 1), jnp.float32),   # ||x2||^2 accumulator
            ],
        ),
        compiler_params=pltpu.CompilerParams(
            dimension_semantics=("parallel", "arbitrary"),
            vmem_limit_bytes=_VMEM_LIMIT_BYTES,
        ),
    )(x1, x2)
    return out[:, 0]


# ---------------------------------------------------------------------------
# Public API
# ---------------------------------------------------------------------------
@functools.partial(jax.jit, static_argnames=("dim", "eps"))
def cosine_similarity(x1, x2, dim=1, eps=1e-8):
    """JAX/Pallas equivalent of torch.nn.functional.cosine_similarity."""
    x1 = jnp.asarray(x1)
    x2 = jnp.asarray(x2)
    assert x1.shape == x2.shape, "x1 and x2 must have matching shapes"
    ndim = x1.ndim
    dim = dim % ndim
    shape = x1.shape
    out_shape = shape[:dim] + shape[dim + 1:]
    out_dtype = jnp.result_type(x1.dtype, x2.dtype)   # match torch: input dtype

    C = shape[dim]
    P = int(math.prod(shape[:dim]))
    S = int(math.prod(shape[dim + 1:]))

    if S > 1 and C <= _MAX_MID_C:
        # Interior dim: zero-copy reshape to (P, C, S), trailing dims on lanes,
        # reduce over C inside the kernel (no HBM transpose).
        out = _cosine_mid(x1.reshape(P, C, S), x2.reshape(P, C, S),
                          eps, out_dtype)
    else:
        # dim is the last axis (moveaxis is then a no-op) or C is too large to
        # keep resident: lane reduction with a tiled reduction axis.
        x1r = jnp.moveaxis(x1, dim, -1).reshape(-1, C)
        x2r = jnp.moveaxis(x2, dim, -1).reshape(-1, C)
        out = _cosine_rows(x1r, x2r, eps, out_dtype)
    return out.reshape(out_shape)


class CosineSimilarity:
    def __init__(self, dim=1, eps=1e-8):
        self.dim = dim
        self.eps = eps

    def __call__(self, x1, x2):
        return cosine_similarity(x1, x2, dim=self.dim, eps=self.eps)


if __name__ == "__main__":
    key = jax.random.PRNGKey(0)
    k1, k2, k3, k4 = jax.random.split(key, 4)

    # Case 1: NCHW tensor, cosine over the channel dim (dim=1) -> "mid" kernel.
    a1 = jax.random.normal(k1, (2, 4, 16, 16), dtype=jnp.float32)
    a2 = jax.random.normal(k2, (2, 4, 16, 16), dtype=jnp.float32)
    cos = CosineSimilarity(dim=1, eps=1e-6)
    out_a = jax.block_until_ready(cos(a1, a2))
    ref_a = jnp.sum(a1 * a2, axis=1) / jnp.maximum(
        jnp.sqrt(jnp.sum(a1 * a1, axis=1)) * jnp.sqrt(jnp.sum(a2 * a2, axis=1)),
        1e-6,
    )
    assert out_a.shape == (2, 16, 16)
    assert out_a.dtype == a1.dtype
    assert jnp.allclose(out_a, ref_a, atol=1e-5, rtol=1e-5)

    # Case 2: (batch, features) with dim = last axis (PyTorch docstring
    # example) -> "rows" kernel with ragged row blocks (no padding).
    b1 = jax.random.normal(k3, (100, 128), dtype=jnp.float32)
    b2 = jax.random.normal(k4, (100, 128), dtype=jnp.float32)
    cos2 = CosineSimilarity(dim=1, eps=1e-8)
    out_b = jax.block_until_ready(cos2(b1, b2))
    ref_b = jnp.sum(b1 * b2, axis=1) / jnp.maximum(
        jnp.sqrt(jnp.sum(b1 * b1, axis=1)) * jnp.sqrt(jnp.sum(b2 * b2, axis=1)),
        1e-8,
    )
    assert out_b.shape == (100,)
    assert jnp.allclose(out_b, ref_b, atol=1e-5, rtol=1e-5)

    print("KERNEL_OK")
</pallas_src>

<mosaic_0001>
module attributes {stable_mosaic.version = 11 : i64} {
  func.func @_cosine_mid_kernel(%arg0: i32, %arg1: i32, %arg2: memref<2x4x128xf32, #tpu.memory_space<vmem>>, %arg3: memref<2x4x128xf32, #tpu.memory_space<vmem>>, %arg4: memref<2x128xf32, #tpu.memory_space<vmem>>) attributes {dimension_semantics = [#tpu.dimension_semantics<parallel>, #tpu.dimension_semantics<parallel>], iteration_bounds = array<i64: 1, 2>, scalar_prefetch = 0 : i64, scratch_operands = 0 : i64, tpu.core_type = #tpu.core_type<tc>, window_params = [{transform_indices = @transform_0, window_bounds = array<i64: 2, 4, 128>}, {transform_indices = @transform_1, window_bounds = array<i64: 2, 4, 128>}, {transform_indices = @transform_2, window_bounds = array<i64: 2, 128>}]} {
    %c0 = arith.constant 0 : index
    %c0_0 = arith.constant 0 : index
    %c0_1 = arith.constant 0 : index
    %0 = vector.load %arg2[%c0, %c0_0, %c0_1] : memref<2x4x128xf32, #tpu.memory_space<vmem>>, vector<2x4x128xf32>
    %c0_2 = arith.constant 0 : index
    %c0_3 = arith.constant 0 : index
    %c0_4 = arith.constant 0 : index
    %1 = vector.load %arg3[%c0_2, %c0_3, %c0_4] : memref<2x4x128xf32, #tpu.memory_space<vmem>>, vector<2x4x128xf32>
    %2 = arith.mulf %0, %1 : vector<2x4x128xf32>
    %cst = arith.constant dense<0.000000e+00> : vector<2x128xf32>
    %3 = vector.multi_reduction <add>, %2, %cst [1] : vector<2x4x128xf32> to vector<2x128xf32>
    %4 = arith.mulf %0, %0 : vector<2x4x128xf32>
    %cst_5 = arith.constant dense<0.000000e+00> : vector<2x128xf32>
    %5 = vector.multi_reduction <add>, %4, %cst_5 [1] : vector<2x4x128xf32> to vector<2x128xf32>
    %6 = arith.mulf %1, %1 : vector<2x4x128xf32>
    %cst_6 = arith.constant dense<0.000000e+00> : vector<2x128xf32>
    %7 = vector.multi_reduction <add>, %6, %cst_6 [1] : vector<2x4x128xf32> to vector<2x128xf32>
    %8 = math.sqrt %5 : vector<2x128xf32>
    %9 = math.sqrt %7 : vector<2x128xf32>
    %10 = arith.mulf %8, %9 : vector<2x128xf32>
    %cst_7 = arith.constant 9.99999997E-7 : f32
    %11 = vector.broadcast %cst_7 : f32 to vector<2x128xf32>
    %12 = arith.maximumf %10, %11 : vector<2x128xf32>
    %13 = tpu.reciprocal %12 : vector<2x128xf32> -> vector<2x128xf32>
    %14 = arith.mulf %3, %13 : vector<2x128xf32>
    %c0_8 = arith.constant 0 : index
    %c0_9 = arith.constant 0 : index
    %15 = vector.load %arg4[%c0_8, %c0_9] : memref<2x128xf32, #tpu.memory_space<vmem>>, vector<2x128xf32>
    tpu.vector_store %arg4[%c0_8, %c0_9], %14 {strides = array<i32>} : memref<2x128xf32, #tpu.memory_space<vmem>>, vector<2x128xf32>,
    return
  }
  func.func @transform_0(%arg0: i32, %arg1: i32) -> (i32, i32, i32) {
    %c0_i32 = arith.constant 0 : i32
    %c0_i32_0 = arith.constant 0 : i32
    return %arg0, %c0_i32, %arg1 : i32, i32, i32
  }
  func.func @transform_1(%arg0: i32, %arg1: i32) -> (i32, i32, i32) {
    %c0_i32 = arith.constant 0 : i32
    %c0_i32_0 = arith.constant 0 : i32
    return %arg0, %c0_i32, %arg1 : i32, i32, i32
  }
  func.func @transform_2(%arg0: i32, %arg1: i32) -> (i32, i32) {
    %c0_i32 = arith.constant 0 : i32
    return %arg0, %arg1 : i32, i32
  }
}

</mosaic_0001>

<llo_original>
// kernel: cosine_similarity.1
$region0: #{cosine_similarity.1}
  #allocation0 [shape = 'u32[]', space=smem, size = 0x4, offset = 0x4, fixed_abs, tag = 'smem constant byte address 0x4 - core index']
  #allocation1 [shape = 'u32[144,128]{1,0:T(1,128)}', space=vmem, size = 0x12000, scoped, tag = 'internal scratch']
  %s0 = inlined_call_operand.vmem [shape: f32[2,4,256], index: 0, kind: input, shape index: {}]
  %s1 = inlined_call_operand.vmem [shape: f32[2,4,256], index: 1, kind: input, shape index: {}]
  %s2 = inlined_call_operand.vmem [shape: f32[2,256], index: 2, kind: output, shape index: {}]
  %s3 = sld [smem:[#allocation0]]
  $region123: #{cosine_similarity.1} parent=0
    _
  %s5 = ssub.s32 1, %s3
  %s6 = scalar_select 0, %s5, %s3
  $region1: #{cosine_similarity.1} parent=0
    #allocation2 [shape = 'u8[8192]{0}', space=vmem, size = 0x2000, scoped, tag = 'input window, operand 0']
    #allocation3 [shape = 'u8[8192]{0}', space=vmem, size = 0x2000, scoped, tag = 'input window, operand 1']
    loop: start=0, step=1, limit=4
    $region2: #{cosine_similarity.1} parent=1 // loop_pre_header
      _
    $region3: #{cosine_similarity.1} parent=1 // loop_header
      %s8 = sphi 0, %s12
      %p9 = scmp.ge.s32.totalorder %s8, 4
      %s15 = sphi 0, %s27
      %s16 = sphi 0, %s23
      %s17 = sphi 0, %s15
      %s18 = sphi 0, %s16
      %s19 = sphi 0, %s17
      %s20 = sphi 0, %s18
      %s32 = sphi 0, %s34
      %s35 = sphi 0, %s32
      %s36 = sphi 0, %s35
      %s52 = sphi 0, %s36
      %s60 = sphi 0, %s62
      %s63 = sphi 0, %s60
      %s64 = sphi 0, %s63
      %s80 = sphi 0, %s64
      %s88 = sphi 0, %s90
      %s91 = sphi 0, %s88
      %s92 = sphi 0, %s91
      %s108 = sphi 0, %s92
    $region4: #{cosine_similarity.1} parent=1 // loop_header_branch
      %11 = sbr.rel (%p9) target = $region8
    $region5: #{cosine_similarity.1} parent=1 // loop_body
      %s13 = ssub.s32 %s8, 1
      %s14 = ssub.s32 %s8, 2
      %s21 = sadd.s32 1, %s16
      %p22 = scmp.ge.s32.totalorder %s21, 2
      %s23 = scalar_select %p22, 0, %s21
      %s24 = sadd.s32 1, %s15
      %s25 = scalar_select %p22, %s24, %s15
      %p26 = scmp.ge.s32.totalorder %s25, 1
      %s27 = scalar_select %p26, 0, %s25
      %s28 = ssub.s32 %s15, %s27
      %s29 = ssub.s32 %s16, %s23
      %s30 = sor.u32 %s28, %s29
      %p31 = scmp.eq.s32.totalorder %s30, 0
      %s33 = sadd.s32 %s32, 1
      %s34 = scalar_select %p31, %s32, %s33
      %p37 = pneg %p31
      %p38 = scmp.eq.s32.totalorder %s8, 1
      %p39 = por %p37, %p38
      %p40 = scmp.ne.s32.totalorder %s32, %s35
      %p41 = scmp.eq.s32.totalorder %s8, 0
      %p42 = por %p40, %p41
      %p43 = scmp.ne.s32.totalorder %s32, %s35
      %p44 = scmp.eq.s32.totalorder %s13, 1
      %p45 = por %p43, %p44
      %p46 = scmp.ne.s32.totalorder %s35, %s36
      %p47 = scmp.eq.s32.totalorder %s13, 0
      %p48 = por %p46, %p47
      %p49 = scmp.ne.s32.totalorder %s35, %s36
      %p50 = scmp.eq.s32.totalorder %s14, 1
      %p51 = por %p49, %p50
      %p53 = scmp.ne.s32.totalorder %s36, %s52
      %p54 = scmp.eq.s32.totalorder %s14, 0
      %p55 = por %p53, %p54
      %s56 = ssub.s32 %s15, %s27
      %s57 = ssub.s32 %s16, %s23
      %s58 = sor.u32 %s56, %s57
      %p59 = scmp.eq.s32.totalorder %s58, 0
      %s61 = sadd.s32 %s60, 1
      %s62 = scalar_select %p59, %s60, %s61
      %p65 = pneg %p59
      %p66 = scmp.eq.s32.totalorder %s8, 1
      %p67 = por %p65, %p66
      %p68 = scmp.ne.s32.totalorder %s60, %s63
      %p69 = scmp.eq.s32.totalorder %s8, 0
      %p70 = por %p68, %p69
      %p71 = scmp.ne.s32.totalorder %s60, %s63
      %p72 = scmp.eq.s32.totalorder %s13, 1
      %p73 = por %p71, %p72
      %p74 = scmp.ne.s32.totalorder %s63, %s64
      %p75 = scmp.eq.s32.totalorder %s13, 0
      %p76 = por %p74, %p75
      %p77 = scmp.ne.s32.totalorder %s63, %s64
      %p78 = scmp.eq.s32.totalorder %s14, 1
      %p79 = por %p77, %p78
      %p81 = scmp.ne.s32.totalorder %s64, %s80
      %p82 = scmp.eq.s32.totalorder %s14, 0
      %p83 = por %p81, %p82
      %s84 = ssub.s32 %s15, %s27
      %s85 = ssub.s32 %s16, %s23
      %s86 = sor.u32 %s84, %s85
      %p87 = scmp.eq.s32.totalorder %s86, 0
      %s89 = sadd.s32 %s88, 1
      %s90 = scalar_select %p87, %s88, %s89
      %p93 = pneg %p87
      %p94 = scmp.eq.s32.totalorder %s8, 1
      %p95 = por %p93, %p94
      %p96 = scmp.ne.s32.totalorder %s88, %s91
      %p97 = scmp.eq.s32.totalorder %s8, 0
      %p98 = por %p96, %p97
      %p99 = scmp.ne.s32.totalorder %s88, %s91
      %p100 = scmp.eq.s32.totalorder %s13, 1
      %p101 = por %p99, %p100
      %p102 = scmp.ne.s32.totalorder %s91, %s92
      %p103 = scmp.eq.s32.totalorder %s13, 0
      %p104 = por %p102, %p103
      %p105 = scmp.ne.s32.totalorder %s91, %s92
      %p106 = scmp.eq.s32.totalorder %s14, 1
      %p107 = por %p105, %p106
      %p109 = scmp.ne.s32.totalorder %s92, %s108
      %p110 = scmp.eq.s32.totalorder %s14, 0
      %p111 = por %p109, %p110
      %p112 = scmp.le.s32.totalorder 1, %s8
      %p113 = scmp.lt.s32.totalorder %s8, 3
      %p114 = pnand %p112, %p113
      %p115 = pneg %p114
      // Predicated region
      $region9: #{cosine_similarity.1} parent=5 // pred_check
        _
      $region10: #{cosine_similarity.1} parent=5 // pred_check_branch
        %117 = sbr.rel (%p114) target = $region12
      $region11: #{cosine_similarity.1} parent=5 // pred_region
        %s118 = ssub.s32 %s8, 1
      $region12: #{cosine_similarity.1} parent=5 // pred_fallthru
        _
      %p119 = scmp.lt.s32.totalorder %s8, 2
      // Predicated region
      $region13: #{cosine_similarity.1} parent=5 // pred_check
        %p120 = pneg %p119
      $region14: #{cosine_similarity.1} parent=5 // pred_check_branch
        %122 = sbr.rel (%p120) target = $region16
      $region15: #{cosine_similarity.1} parent=5 // pred_region
        // Predicated region
        $region17: #{cosine_similarity.1} parent=15 // pred_check
          %p123 = pneg %p42
        $region18: #{cosine_similarity.1} parent=15 // pred_check_branch
          %125 = sbr.rel (%p123) target = $region20
        $region19: #{cosine_similarity.1} parent=15 // pred_region
          %s126 = sand.u32 %s32, 1
          %s127 = sand.u32 %s32, 1
          %s128 = smul.addr %s127, 8
          %s129 = scalar_lea.vmem [#allocation2], %s128
          %s130 = smul.u32 2, %s15
          %s131 = smul.addr %s130, 2
          %s132 = sadd.s32 %s16, %s131
          %s133 = smul.addr %s132, 4
          %s134 = scalar_lea.vmem %s0, %s133
          // Predicated region
          $region21: #{cosine_similarity.1} parent=19 // pred_check
            _
          $region22: #{cosine_similarity.1} parent=19 // pred_check_branch
            %136 = sbr.rel (0) target = $region24
          $region23: #{cosine_similarity.1} parent=19 // pred_region
            // Predicated region
            $region25: #{cosine_similarity.1} parent=23 // pred_check
              _
            $region26: #{cosine_similarity.1} parent=23 // pred_check_branch
              %138 = sbr.rel target = $region28
            $region27: #{cosine_similarity.1} parent=23 // pred_region
              // Predicated region
              $region40: #{cosine_similarity.1} parent=27 // pred_check
                _
              $region41: #{cosine_similarity.1} parent=27 // pred_check_branch
                %156 = sbr.rel (0) target = $region43
              $region42: #{cosine_similarity.1} parent=27 // pred_region
                loop: start=0, step=1, limit=1
                $region44: #{cosine_similarity.1} parent=42 // loop_pre_header
                  _
                $region45: #{cosine_similarity.1} parent=42 // loop_header
                  %s158 = sphi 0, %s162
                  %p159 = scmp.ge.s32.totalorder %s158, 1
                  %s163 = sphi %s134, %s134
                  %s164 = sphi %s129, %s129
                $region46: #{cosine_similarity.1} parent=42 // loop_header_branch
                  %161 = sbr.rel (%p159) target = $region50
                $region47: #{cosine_similarity.1} parent=42 // loop_body
                  _
                $region48: #{cosine_similarity.1} parent=42 // loop_footer
                  %s162 = sadd.s32 1, %s158
                $region49: #{cosine_similarity.1} parent=42 // loop_footer_branch
                  %157 = sbr.rel target = $region45
                $region50: #{cosine_similarity.1} parent=42 // loop_exit
                  _
                %s166 = ssub.s32 16, 1
                loop: start=0, step=1, limit=1
                $region51: #{cosine_similarity.1} parent=42 // loop_pre_header
                  _
                $region52: #{cosine_similarity.1} parent=42 // loop_header
                  %s168 = sphi 0, %s172
                  %p169 = scmp.ge.s32.totalorder %s168, 1
                  %s173 = sphi %s134, %s134
                  %s174 = sphi %s129, %s129
                $region53: #{cosine_similarity.1} parent=42 // loop_header_branch
                  %171 = sbr.rel (%p169) target = $region57
                $region54: #{cosine_similarity.1} parent=42 // loop_body
                  %v175 = vld [vmem:[%s173] sm:%s166]
                  %176 = vst [vmem:[%s174] sm:%s166] %v175
                  %v177 = vld [vmem:[%s173 + $0x8] sm:%s166]
                  %178 = vst [vmem:[%s174 + $0x4] sm:%s166] %v177
                $region55: #{cosine_similarity.1} parent=42 // loop_footer
                  %s172 = sadd.s32 1, %s168
                $region56: #{cosine_similarity.1} parent=42 // loop_footer_branch
                  %167 = sbr.rel target = $region52
                $region57: #{cosine_similarity.1} parent=42 // loop_exit
                  _
              $region43: #{cosine_similarity.1} parent=27 // pred_fallthru
                _
            $region28: #{cosine_similarity.1} parent=23 // pred_fallthru
              _
            // Predicated region
            $region29: #{cosine_similarity.1} parent=23 // pred_check
              _
            $region30: #{cosine_similarity.1} parent=23 // pred_check_branch
              %140 = sbr.rel (0) target = $region32
            $region31: #{cosine_similarity.1} parent=23 // pred_region
              %s142 = ssub.s32 16, 1
              loop: start=0, step=1, limit=1
              $region33: #{cosine_similarity.1} parent=31 // loop_pre_header
                _
              $region34: #{cosine_similarity.1} parent=31 // loop_header
                %s144 = sphi 0, %s148
                %p145 = scmp.ge.s32.totalorder %s144, 1
                %s149 = sphi %s134, %s134
                %s150 = sphi %s129, %s129
              $region35: #{cosine_similarity.1} parent=31 // loop_header_branch
                %147 = sbr.rel (%p145) target = $region39
              $region36: #{cosine_similarity.1} parent=31 // loop_body
                %v151 = vld [vmem:[%s149] sm:%s142]
                %152 = vst [vmem:[%s150] sm:%s142] %v151
                %v153 = vld [vmem:[%s149 + $0x8] sm:%s142]
                %154 = vst [vmem:[%s150 + $0x4] sm:%s142] %v153
              $region37: #{cosine_similarity.1} parent=31 // loop_footer
                %s148 = sadd.s32 1, %s144
              $region38: #{cosine_similarity.1} parent=31 // loop_footer_branch
                %143 = sbr.rel target = $region34
              $region39: #{cosine_similarity.1} parent=31 // loop_exit
                _
            $region32: #{cosine_similarity.1} parent=23 // pred_fallthru
              _
          $region24: #{cosine_similarity.1} parent=19 // pred_fallthru
            _
          %179 = vnop
        $region20: #{cosine_similarity.1} parent=15 // pred_fallthru
          _
        // Predicated region
        $region58: #{cosine_similarity.1} parent=15 // pred_check
          %p180 = pneg %p70
        $region59: #{cosine_similarity.1} parent=15 // pred_check_branch
          %182 = sbr.rel (%p180) target = $region61
        $region60: #{cosine_similarity.1} parent=15 // pred_region
          %s183 = sand.u32 %s60, 1
          %s184 = sand.u32 %s60, 1
          %s185 = smul.addr %s184, 8
          %s186 = scalar_lea.vmem [#allocation3], %s185
          %s187 = smul.u32 2, %s15
          %s188 = smul.addr %s187, 2
          %s189 = sadd.s32 %s16, %s188
          %s190 = smul.addr %s189, 4
          %s191 = scalar_lea.vmem %s1, %s190
          // Predicated region
          $region62: #{cosine_similarity.1} parent=60 // pred_check
            _
          $region63: #{cosine_similarity.1} parent=60 // pred_check_branch
            %193 = sbr.rel (0) target = $region65
          $region64: #{cosine_similarity.1} parent=60 // pred_region
            // Predicated region
            $region66: #{cosine_similarity.1} parent=64 // pred_check
              _
            $region67: #{cosine_similarity.1} parent=64 // pred_check_branch
              %195 = sbr.rel target = $region69
            $region68: #{cosine_similarity.1} parent=64 // pred_region
              // Predicated region
              $region81: #{cosine_similarity.1} parent=68 // pred_check
                _
              $region82: #{cosine_similarity.1} parent=68 // pred_check_branch
                %213 = sbr.rel (0) target = $region84
              $region83: #{cosine_similarity.1} parent=68 // pred_region
                loop: start=0, step=1, limit=1
                $region85: #{cosine_similarity.1} parent=83 // loop_pre_header
                  _
                $region86: #{cosine_similarity.1} parent=83 // loop_header
                  %s215 = sphi 0, %s219
                  %p216 = scmp.ge.s32.totalorder %s215, 1
                  %s220 = sphi %s191, %s191
                  %s221 = sphi %s186, %s186
                $region87: #{cosine_similarity.1} parent=83 // loop_header_branch
                  %218 = sbr.rel (%p216) target = $region91
                $region88: #{cosine_similarity.1} parent=83 // loop_body
                  _
                $region89: #{cosine_similarity.1} parent=83 // loop_footer
                  %s219 = sadd.s32 1, %s215
                $region90: #{cosine_similarity.1} parent=83 // loop_footer_branch
                  %214 = sbr.rel target = $region86
                $region91: #{cosine_similarity.1} parent=83 // loop_exit
                  _
                %s223 = ssub.s32 16, 1
                loop: start=0, step=1, limit=1
                $region92: #{cosine_similarity.1} parent=83 // loop_pre_header
                  _
                $region93: #{cosine_similarity.1} parent=83 // loop_header
                  %s225 = sphi 0, %s229
                  %p226 = scmp.ge.s32.totalorder %s225, 1
                  %s230 = sphi %s191, %s191
                  %s231 = sphi %s186, %s186
                $region94: #{cosine_similarity.1} parent=83 // loop_header_branch
                  %228 = sbr.rel (%p226) target = $region98
                $region95: #{cosine_similarity.1} parent=83 // loop_body
                  %v232 = vld [vmem:[%s230] sm:%s223]
                  %233 = vst [vmem:[%s231] sm:%s223] %v232
                  %v234 = vld [vmem:[%s230 + $0x8] sm:%s223]
                  %235 = vst [vmem:[%s231 + $0x4] sm:%s223] %v234
                $region96: #{cosine_similarity.1} parent=83 // loop_footer
                  %s229 = sadd.s32 1, %s225
                $region97: #{cosine_similarity.1} parent=83 // loop_footer_branch
                  %224 = sbr.rel target = $region93
                $region98: #{cosine_similarity.1} parent=83 // loop_exit
                  _
              $region84: #{cosine_similarity.1} parent=68 // pred_fallthru
                _
            $region69: #{cosine_similarity.1} parent=64 // pred_fallthru
              _
            // Predicated region
            $region70: #{cosine_similarity.1} parent=64 // pred_check
              _
            $region71: #{cosine_similarity.1} parent=64 // pred_check_branch
              %197 = sbr.rel (0) target = $region73
            $region72: #{cosine_similarity.1} parent=64 // pred_region
              %s199 = ssub.s32 16, 1
              loop: start=0, step=1, limit=1
              $region74: #{cosine_similarity.1} parent=72 // loop_pre_header
                _
              $region75: #{cosine_similarity.1} parent=72 // loop_header
                %s201 = sphi 0, %s205
                %p202 = scmp.ge.s32.totalorder %s201, 1
                %s206 = sphi %s191, %s191
                %s207 = sphi %s186, %s186
              $region76: #{cosine_similarity.1} parent=72 // loop_header_branch
                %204 = sbr.rel (%p202) target = $region80
              $region77: #{cosine_similarity.1} parent=72 // loop_body
                %v208 = vld [vmem:[%s206] sm:%s199]
                %209 = vst [vmem:[%s207] sm:%s199] %v208
                %v210 = vld [vmem:[%s206 + $0x8] sm:%s199]
                %211 = vst [vmem:[%s207 + $0x4] sm:%s199] %v210
              $region78: #{cosine_similarity.1} parent=72 // loop_footer
                %s205 = sadd.s32 1, %s201
              $region79: #{cosine_similarity.1} parent=72 // loop_footer_branch
                %200 = sbr.rel target = $region75
              $region80: #{cosine_similarity.1} parent=72 // loop_exit
                _
            $region73: #{cosine_similarity.1} parent=64 // pred_fallthru
              _
          $region65: #{cosine_similarity.1} parent=60 // pred_fallthru
            _
          %236 = vnop
        $region61: #{cosine_similarity.1} parent=15 // pred_fallthru
          _
      $region16: #{cosine_similarity.1} parent=5 // pred_fallthru
        _
      %p237 = scmp.le.s32.totalorder 1, %s8
      %p238 = scmp.lt.s32.totalorder %s8, 3
      %p239 = pnand %p237, %p238
      %p240 = pneg %p239
      // Predicated region
      $region99: #{cosine_similarity.1} parent=5 // pred_check
        _
      $region100: #{cosine_similarity.1} parent=5 // pred_check_branch
        %242 = sbr.rel (%p239) target = $region102
      $region101: #{cosine_similarity.1} parent=5 // pred_region
        %s243 = ssub.s32 %s8, 1
        %s244 = sand.u32 %s35, 1
        %s245 = sand.u32 %s35, 1
        %s246 = smul.addr %s245, 8
        %s247 = scalar_lea.vmem [#allocation2], %s246
        // Predicated region
        $region103: #{cosine_similarity.1} parent=101 // pred_check
          %p248 = pneg %p48
        $region104: #{cosine_similarity.1} parent=101 // pred_check_branch
          %250 = sbr.rel (%p248) target = $region106
        $region105: #{cosine_similarity.1} parent=101 // pred_region
          _
        $region106: #{cosine_similarity.1} parent=101 // pred_fallthru
          _
        %s251 = sand.u32 %s63, 1
        %s252 = sand.u32 %s63, 1
        %s253 = smul.addr %s252, 8
        %s254 = scalar_lea.vmem [#allocation3], %s253
        // Predicated region
        $region107: #{cosine_similarity.1} parent=101 // pred_check
          %p255 = pneg %p76
        $region108: #{cosine_similarity.1} parent=101 // pred_check_branch
          %257 = sbr.rel (%p255) target = $region110
        $region109: #{cosine_similarity.1} parent=101 // pred_region
          _
        $region110: #{cosine_similarity.1} parent=101 // pred_fallthru
          _
        %s258 = sand.u32 %s35, 1
        %s259 = sand.u32 %s35, 1
        %s260 = smul.addr %s259, 8
        %s261 = scalar_lea.vmem [#allocation2], %s260
        %p262 = pneg %p48
        %p263 = pneg %p45
        %s264 = sand.u32 %s63, 1
        %s265 = sand.u32 %s63, 1
        %s266 = smul.addr %s265, 8
        %s267 = scalar_lea.vmem [#allocation3], %s266
        %p268 = pneg %p76
        %p269 = pneg %p73
        %p270 = pneg %p104
        %p271 = pneg %p101
        %p272 = scmp.lt.s32.totalorder %s17, 0
        %s273 = scalar_select %p272, %s17, 0
        %p274 = scmp.lt.s32.totalorder %s18, 1
        %s275 = scalar_select %p274, %s18, 1
        %s276 = smul.addr %s273, 2
        %s277 = sadd.s32 %s275, %s276
        %s278 = smul.addr %s277, 2
        %s279 = scalar_lea.vmem %s2, %s278
        %s280 = smul.u32 2, %s17
        %s281 = smul.u32 2, %s17
        %p282 = scmp.lt.s32.totalorder %s17, 0
        %s283 = scalar_select %p282, %s17, 0
        %p284 = scmp.lt.s32.totalorder %s18, 1
        %s285 = scalar_select %p284, %s18, 1
        %s286 = smul.addr %s283, 2
        %s287 = sadd.s32 %s285, %s286
        %s288 = smul.addr %s287, 2
        %s289 = scalar_lea.vmem %s2, %s288
        %v290 = vld [vmem:[%s247] sm:$0xf]
        %v291 = vld [vmem:[%s247 + $0x4] sm:$0xf]
        %v292 = vld [vmem:[%s254] sm:$0xf]
        %v293 = vld [vmem:[%s254 + $0x4] sm:$0xf]
        %v294 = vmul.f32 %v290, %v292
        %v295 = vmul.f32 %v291, %v293
        %vm296 = vcmask 1043456
        %v297 = vsel %vm296, %v294, 0.0
        %v298 = vrot.slane %v297, 4
        %v299 = vadd.f32 %v297, %v298
        %v300 = vrot.slane %v299, 2
        %v301 = vadd.f32 %v299, %v300
        %v302 = vrot.slane %v301, 1
        %v303 = vadd.f32 %v301, %v302
        %v304 = vsel %vm296, %v295, 0.0
        %v305 = vrot.slane %v304, 4
        %v306 = vadd.f32 %v304, %v305
        %v307 = vrot.slane %v306, 2
        %v308 = vadd.f32 %v306, %v307
        %v309 = vrot.slane %v308, 1
        %v310 = vadd.f32 %v308, %v309
        %v311 = vmul.f32 %v290, %v290
        %v312 = vmul.f32 %v291, %v291
        %v313 = vsel %vm296, %v311, 0.0
        %v314 = vrot.slane %v313, 4
        %v315 = vadd.f32 %v313, %v314
        %v316 = vrot.slane %v315, 2
        %v317 = vadd.f32 %v315, %v316
        %v318 = vrot.slane %v317, 1
        %v319 = vadd.f32 %v317, %v318
        %v320 = vsel %vm296, %v312, 0.0
        %v321 = vrot.slane %v320, 4
        %v322 = vadd.f32 %v320, %v321
        %v323 = vrot.slane %v322, 2
        %v324 = vadd.f32 %v322, %v323
        %v325 = vrot.slane %v324, 1
        %v326 = vadd.f32 %v324, %v325
        %v327 = vmul.f32 %v292, %v292
        %v328 = vmul.f32 %v293, %v293
        %v329 = vsel %vm296, %v327, 0.0
        %v330 = vrot.slane %v329, 4
        %v331 = vadd.f32 %v329, %v330
        %v332 = vrot.slane %v331, 2
        %v333 = vadd.f32 %v331, %v332
        %v334 = vrot.slane %v333, 1
        %v335 = vadd.f32 %v333, %v334
        %v336 = vsel %vm296, %v328, 0.0
        %v337 = vrot.slane %v336, 4
        %v338 = vadd.f32 %v336, %v337
        %v339 = vrot.slane %v338, 2
        %v340 = vadd.f32 %v338, %v339
        %v341 = vrot.slane %v340, 1
        %v342 = vadd.f32 %v340, %v341
        %v343 = vrsqrt.pop %v319
        %v344 = vmul.f32 %v319, %v343
        %vm345 = vcmp.eq.f32.partialorder %v319, inf
        %v346 = vsel %vm345, %v319, %v344
        %vm347 = vcmp.eq.f32.partialorder %v319, 0.0
        %v348 = vand.u32 %v319, 2147483648
        %v349 = vsel %vm347, %v348, %v346
        %v350 = vrsqrt.pop %v326
        %v351 = vmul.f32 %v326, %v350
        %vm352 = vcmp.eq.f32.partialorder %v326, inf
        %v353 = vsel %vm352, %v326, %v351
        %vm354 = vcmp.eq.f32.partialorder %v326, 0.0
        %v355 = vand.u32 %v326, 2147483648
        %v356 = vsel %vm354, %v355, %v353
        %v357 = vrsqrt.pop %v335
        %v358 = vmul.f32 %v335, %v357
        %vm359 = vcmp.eq.f32.partialorder %v335, inf
        %v360 = vsel %vm359, %v335, %v358
        %vm361 = vcmp.eq.f32.partialorder %v335, 0.0
        %v362 = vand.u32 %v335, 2147483648
        %v363 = vsel %vm361, %v362, %v360
        %v364 = vrsqrt.pop %v342
        %v365 = vmul.f32 %v342, %v364
        %vm366 = vcmp.eq.f32.partialorder %v342, inf
        %v367 = vsel %vm366, %v342, %v365
        %vm368 = vcmp.eq.f32.partialorder %v342, 0.0
        %v369 = vand.u32 %v342, 2147483648
        %v370 = vsel %vm368, %v369, %v367
        %v371 = vmul.f32 %v349, %v363
        %v372 = vmul.f32 %v356, %v370
        %v373 = vmax.f32 %v371, 1e-06
        %v374 = vmax.f32 %v372, 1e-06
        %v375 = vrcp.pop %v373
        %v376 = vrcp.pop %v374
        %v377 = vmul.f32 %v303, %v375
        %v378 = vmul.f32 %v310, %v376
        %vm381 = vcmask 1041409
        %v382 = vsel %vm381, %v378, %v377
        %384 = vst [vmem:[%s289] sm:$0x3] %v382
        %p385 = scmp.lt.s32.totalorder %s17, 0
        %s386 = scalar_select %p385, %s17, 0
        %p387 = scmp.lt.s32.totalorder %s18, 1
        %s388 = scalar_select %p387, %s18, 1
        %s389 = smul.addr %s386, 2
        %s390 = sadd.s32 %s388, %s389
        %s391 = smul.addr %s390, 2
        %s392 = scalar_lea.vmem %s2, %s391
        // Predicated region
        $region111: #{cosine_similarity.1} parent=101 // pred_check
          %p393 = pneg %p101
        $region112: #{cosine_similarity.1} parent=101 // pred_check_branch
          %395 = sbr.rel (%p393) target = $region114
        $region113: #{cosine_similarity.1} parent=101 // pred_region
          _
        $region114: #{cosine_similarity.1} parent=101 // pred_fallthru
          _
      $region102: #{cosine_similarity.1} parent=5 // pred_fallthru
        _
      %p396 = scmp.le.s32.totalorder 2, %s8
      // Predicated region
      $region115: #{cosine_similarity.1} parent=5 // pred_check
        %p397 = pneg %p396
      $region116: #{cosine_similarity.1} parent=5 // pred_check_branch
        %399 = sbr.rel (%p397) target = $region118
      $region117: #{cosine_similarity.1} parent=5 // pred_region
        %s400 = ssub.s32 %s8, 2
        // Predicated region
        $region119: #{cosine_similarity.1} parent=117 // pred_check
          %p401 = pneg %p107
        $region120: #{cosine_similarity.1} parent=117 // pred_check_branch
          %403 = sbr.rel (%p401) target = $region122
        $region121: #{cosine_similarity.1} parent=117 // pred_region
          %p404 = scmp.lt.s32.totalorder %s19, 0
          %s405 = scalar_select %p404, %s19, 0
          %p406 = scmp.lt.s32.totalorder %s20, 1
          %s407 = scalar_select %p406, %s20, 1
          %s408 = smul.addr %s405, 2
          %s409 = sadd.s32 %s407, %s408
          %s410 = smul.addr %s409, 2
          %s411 = scalar_lea.vmem %s2, %s410
        $region122: #{cosine_similarity.1} parent=117 // pred_fallthru
          _
      $region118: #{cosine_similarity.1} parent=5 // pred_fallthru
        _
    $region6: #{cosine_similarity.1} parent=1 // loop_footer
      %s12 = sadd.s32 1, %s8
    $region7: #{cosine_similarity.1} parent=1 // loop_footer_branch
      %7 = sbr.rel target = $region3
    $region8: #{cosine_similarity.1} parent=1 // loop_exit
      _

</llo_original>
